<compile_context>
chip_gen: v5e
topology: v5e:2x2
jax: 0.10.0
libtpu: 0.0.40
codegen_flags: <defaults>
</compile_context>

<pallas_src>
import functools

import jax
import jax.numpy as jnp
from jax.experimental import pallas as pl
from jax.experimental.pallas import tpu as pltpu


IN_F = 5
HIDDEN = 128
OUT_F = 5

_MAX_TILE_B = 8192  # lane-axis batch tile; multiple of 128, VMEM-safe on v5e/v6e/v7x


def _round_up(n, m):
    return ((n + m - 1) // m) * m


def _cdiv(a, b):
    return (a + b - 1) // b


def _pick_tile_b(batch):
    n_tiles = max(1, _cdiv(batch, _MAX_TILE_B))
    # v7x has 2 TensorCores: make sure the "parallel" batch axis has >= 2 grid
    # steps whenever the batch is big enough to split (no-op on v5e/v6e).
    if batch >= 256 and n_tiles < 2:
        n_tiles = 2
    return _round_up(_cdiv(batch, n_tiles), 128)


def mlp_kernel(x_ref, w1_ref, b1_ref, w2t_ref, b2_ref, o_ref):
    # x_ref: (5, TILE_B) f32, feature-major (batch on the lane axis).
    x = x_ref[...]
    w1 = w1_ref[...]          # (128, 5) f32
    # ---- Layer 1 on the VPU: 5 rank-1 broadcast-FMAs instead of a K=5 MXU dot.
    h = w1[:, 0:1] * x[0:1, :]
    for k in range(1, IN_F):
        h = h + w1[:, k:k+1] * x[k:k+1, :]
    h = jnp.maximum(h + b1_ref[...], 0.0)            # (128, TILE_B) f32

    # ---- Layer 2 on the VPU: per-output-row multiply + sublane reduction
    # (M=5 would waste the MXU and force per-256-column weight reloads).
    w2t = w2t_ref[...]        # (128, 5) f32 (pre-transposed in the wrapper)
    b2 = b2_ref[...]          # (5, 1)  f32
    for m in range(OUT_F):
        ym = jnp.sum(h * w2t[:, m:m+1], axis=0, keepdims=True)   # (1, TILE_B)
        o_ref[m:m+1, :] = (ym + b2[m:m+1, :]).astype(o_ref.dtype)


@functools.partial(jax.jit, static_argnames=("tile_b",))
def classification_model_forward(x, w1, b1, w2, b2, *, tile_b=None):
    """x: (B, 5) f32; w1: (128, 5); b1: (128,); w2: (5, 128); b2: (5,) -> (B, 5) f32."""
    B = x.shape[0]

    if tile_b is None:
        tile_b = _pick_tile_b(B)
    else:
        tile_b = max(128, _round_up(int(tile_b), 128))  # keep lane constraint valid
    b_pad = _round_up(B, tile_b)
    grid = (b_pad // tile_b,)

    # Layout plumbing (fused by XLA under this jit): feature-major + pad batch.
    x_t = jnp.transpose(x.astype(jnp.float32))        # (5, B)
    if b_pad != B:
        x_t = jnp.pad(x_t, ((0, 0), (0, b_pad - B)))

    w1_c = w1.astype(jnp.float32)                      # (128, 5)
    b1_c = b1.reshape(-1, 1).astype(jnp.float32)       # (128, 1)
    w2t_c = jnp.transpose(w2).astype(jnp.float32)      # (128, 5)
    b2_c = b2.reshape(-1, 1).astype(jnp.float32)       # (5, 1)

    out_t = pl.pallas_call(
        mlp_kernel,
        out_shape=jax.ShapeDtypeStruct((OUT_F, b_pad), jnp.float32),
        grid_spec=pltpu.PrefetchScalarGridSpec(
            num_scalar_prefetch=0,
            grid=grid,
            in_specs=[
                # batch-tiled activation: new lane-dense block each grid step
                pl.BlockSpec((IN_F, tile_b), lambda i: (0, i)),
                # weights / biases: constant block index -> DMA'd once,
                # VMEM-resident across the whole grid
                pl.BlockSpec(w1_c.shape, lambda i: (0, 0)),
                pl.BlockSpec(b1_c.shape, lambda i: (0, 0)),
                pl.BlockSpec(w2t_c.shape, lambda i: (0, 0)),
                pl.BlockSpec(b2_c.shape, lambda i: (0, 0)),
            ],
            out_specs=pl.BlockSpec((OUT_F, tile_b), lambda i: (0, i)),
        ),
        compiler_params=pltpu.CompilerParams(
            dimension_semantics=("parallel",),   # 2-TC sharding on v7x
            # 32 MiB is safe on every generation (v7x scoped default); v5e/v6e
            # could go to 64 MiB + larger tiles, kept conservative here.
            vmem_limit_bytes=32 * 1024 * 1024,
        ),
    )(x_t, w1_c, b1_c, w2t_c, b2_c)

    return jnp.transpose(out_t[:, :B])  # (B, 5) f32


def init_params(key):
    """Deterministic init matching nn.Linear shapes/layout (PyTorch default-like)."""
    k1, k2, k3, k4 = jax.random.split(key, 4)
    lim1 = 1.0 / (IN_F ** 0.5)
    lim2 = 1.0 / (HIDDEN ** 0.5)
    w1 = jax.random.uniform(k1, (HIDDEN, IN_F), jnp.float32, -lim1, lim1)   # (128, 5)
    b1 = jax.random.uniform(k2, (HIDDEN,), jnp.float32, -lim1, lim1)        # (128,)
    w2 = jax.random.uniform(k3, (OUT_F, HIDDEN), jnp.float32, -lim2, lim2)  # (5, 128)
    b2 = jax.random.uniform(k4, (OUT_F,), jnp.float32, -lim2, lim2)         # (5,)
    return w1, b1, w2, b2


if __name__ == "__main__":
    key = jax.random.PRNGKey(0)
    kx, kp = jax.random.split(key)
    w1, b1, w2, b2 = init_params(kp)

    def ref_forward(xs):
        # Full-precision f32 reference mirroring nn.Linear semantics.
        h = jnp.maximum(
            jnp.dot(xs, w1.T, precision=jax.lax.Precision.HIGHEST) + b1, 0.0)
        return jnp.dot(h, w2.T, precision=jax.lax.Precision.HIGHEST) + b2

    # Small batch (single grid step).
    batch = 8
    x = jax.random.normal(kx, (batch, 5), jnp.float32)
    out = jax.block_until_ready(classification_model_forward(x, w1, b1, w2, b2))
    assert out.shape == (batch, 5)
    assert jnp.allclose(out, ref_forward(x), atol=1e-3, rtol=1e-3)

    # Batch exercising a 2-step grid (padding sliced off before the transpose).
    batch2 = 300
    x2 = jax.random.normal(jax.random.PRNGKey(1), (batch2, 5), jnp.float32)
    out2 = jax.block_until_ready(classification_model_forward(x2, w1, b1, w2, b2))
    assert out2.shape == (batch2, 5)
    assert jnp.allclose(out2, ref_forward(x2), atol=1e-3, rtol=1e-3)

    print("KERNEL_OK")
</pallas_src>

<mosaic_0001>
module attributes {stable_mosaic.version = 11 : i64} {
  func.func @mlp_kernel(%arg0: i32, %arg1: memref<5x128xf32, #tpu.memory_space<vmem>>, %arg2: memref<128x5xf32, #tpu.memory_space<vmem>>, %arg3: memref<128x1xf32, #tpu.memory_space<vmem>>, %arg4: memref<128x5xf32, #tpu.memory_space<vmem>>, %arg5: memref<5x1xf32, #tpu.memory_space<vmem>>, %arg6: memref<5x128xf32, #tpu.memory_space<vmem>>) attributes {dimension_semantics = [#tpu.dimension_semantics<parallel>], iteration_bounds = array<i64: 1>, scalar_prefetch = 0 : i64, scratch_operands = 0 : i64, tpu.core_type = #tpu.core_type<tc>, window_params = [{transform_indices = @transform_0, window_bounds = array<i64: 5, 128>}, {pipeline_mode = #tpu.pipeline_mode<synchronous>, transform_indices = @transform_1, window_bounds = array<i64: 128, 5>}, {pipeline_mode = #tpu.pipeline_mode<synchronous>, transform_indices = @transform_2, window_bounds = array<i64: 128, 1>}, {pipeline_mode = #tpu.pipeline_mode<synchronous>, transform_indices = @transform_3, window_bounds = array<i64: 128, 5>}, {pipeline_mode = #tpu.pipeline_mode<synchronous>, transform_indices = @transform_4, window_bounds = array<i64: 5, 1>}, {transform_indices = @transform_5, window_bounds = array<i64: 5, 128>}]} {
    %c0 = arith.constant 0 : index
    %c0_0 = arith.constant 0 : index
    %0 = vector.load %arg1[%c0, %c0_0] : memref<5x128xf32, #tpu.memory_space<vmem>>, vector<5x128xf32>
    %c0_1 = arith.constant 0 : index
    %c0_2 = arith.constant 0 : index
    %1 = vector.load %arg2[%c0_1, %c0_2] : memref<128x5xf32, #tpu.memory_space<vmem>>, vector<128x5xf32>
    %2 = vector.extract_strided_slice %1 {offsets = [0, 0], sizes = [128, 1], strides = [1, 1]} : vector<128x5xf32> to vector<128x1xf32>
    %3 = vector.extract_strided_slice %0 {offsets = [0, 0], sizes = [1, 128], strides = [1, 1]} : vector<5x128xf32> to vector<1x128xf32>
    %4 = vector.broadcast %2 : vector<128x1xf32> to vector<128x128xf32>
    %5 = vector.broadcast %3 : vector<1x128xf32> to vector<128x128xf32>
    %6 = arith.mulf %4, %5 : vector<128x128xf32>
    %7 = vector.extract_strided_slice %1 {offsets = [0, 1], sizes = [128, 1], strides = [1, 1]} : vector<128x5xf32> to vector<128x1xf32>
    %8 = vector.extract_strided_slice %0 {offsets = [1, 0], sizes = [1, 128], strides = [1, 1]} : vector<5x128xf32> to vector<1x128xf32>
    %9 = vector.broadcast %7 : vector<128x1xf32> to vector<128x128xf32>
    %10 = vector.broadcast %8 : vector<1x128xf32> to vector<128x128xf32>
    %11 = arith.mulf %9, %10 : vector<128x128xf32>
    %12 = arith.addf %6, %11 : vector<128x128xf32>
    %13 = vector.extract_strided_slice %1 {offsets = [0, 2], sizes = [128, 1], strides = [1, 1]} : vector<128x5xf32> to vector<128x1xf32>
    %14 = vector.extract_strided_slice %0 {offsets = [2, 0], sizes = [1, 128], strides = [1, 1]} : vector<5x128xf32> to vector<1x128xf32>
    %15 = vector.broadcast %13 : vector<128x1xf32> to vector<128x128xf32>
    %16 = vector.broadcast %14 : vector<1x128xf32> to vector<128x128xf32>
    %17 = arith.mulf %15, %16 : vector<128x128xf32>
    %18 = arith.addf %12, %17 : vector<128x128xf32>
    %19 = vector.extract_strided_slice %1 {offsets = [0, 3], sizes = [128, 1], strides = [1, 1]} : vector<128x5xf32> to vector<128x1xf32>
    %20 = vector.extract_strided_slice %0 {offsets = [3, 0], sizes = [1, 128], strides = [1, 1]} : vector<5x128xf32> to vector<1x128xf32>
    %21 = vector.broadcast %19 : vector<128x1xf32> to vector<128x128xf32>
    %22 = vector.broadcast %20 : vector<1x128xf32> to vector<128x128xf32>
    %23 = arith.mulf %21, %22 : vector<128x128xf32>
    %24 = arith.addf %18, %23 : vector<128x128xf32>
    %25 = vector.extract_strided_slice %1 {offsets = [0, 4], sizes = [128, 1], strides = [1, 1]} : vector<128x5xf32> to vector<128x1xf32>
    %26 = vector.extract_strided_slice %0 {offsets = [4, 0], sizes = [1, 128], strides = [1, 1]} : vector<5x128xf32> to vector<1x128xf32>
    %27 = vector.broadcast %25 : vector<128x1xf32> to vector<128x128xf32>
    %28 = vector.broadcast %26 : vector<1x128xf32> to vector<128x128xf32>
    %29 = arith.mulf %27, %28 : vector<128x128xf32>
    %30 = arith.addf %24, %29 : vector<128x128xf32>
    %c0_3 = arith.constant 0 : index
    %c0_4 = arith.constant 0 : index
    %31 = vector.load %arg3[%c0_3, %c0_4] : memref<128x1xf32, #tpu.memory_space<vmem>>, vector<128x1xf32>
    %32 = vector.broadcast %31 : vector<128x1xf32> to vector<128x128xf32>
    %33 = arith.addf %30, %32 : vector<128x128xf32>
    %cst = arith.constant 0.000000e+00 : f32
    %34 = vector.broadcast %cst : f32 to vector<128x128xf32>
    %35 = arith.maximumf %33, %34 : vector<128x128xf32>
    %c0_5 = arith.constant 0 : index
    %c0_6 = arith.constant 0 : index
    %36 = vector.load %arg4[%c0_5, %c0_6] : memref<128x5xf32, #tpu.memory_space<vmem>>, vector<128x5xf32>
    %c0_7 = arith.constant 0 : index
    %c0_8 = arith.constant 0 : index
    %37 = vector.load %arg5[%c0_7, %c0_8] : memref<5x1xf32, #tpu.memory_space<vmem>>, vector<5x1xf32>
    %38 = vector.extract_strided_slice %36 {offsets = [0, 0], sizes = [128, 1], strides = [1, 1]} : vector<128x5xf32> to vector<128x1xf32>
    %39 = vector.broadcast %38 : vector<128x1xf32> to vector<128x128xf32>
    %40 = arith.mulf %35, %39 : vector<128x128xf32>
    %cst_9 = arith.constant dense<0.000000e+00> : vector<128xf32>
    %41 = vector.multi_reduction <add>, %40, %cst_9 [0] : vector<128x128xf32> to vector<128xf32>
    %42 = vector.shape_cast %41 : vector<128xf32> to vector<1x128xf32>
    %43 = vector.extract_strided_slice %37 {offsets = [0, 0], sizes = [1, 1], strides = [1, 1]} : vector<5x1xf32> to vector<1x1xf32>
    %44 = vector.broadcast %43 : vector<1x1xf32> to vector<1x128xf32>
    %45 = arith.addf %42, %44 : vector<1x128xf32>
    %c0_10 = arith.constant 0 : index
    %c0_11 = arith.constant 0 : index
    %46 = vector.load %arg6[%c0_10, %c0_11] : memref<5x128xf32, #tpu.memory_space<vmem>>, vector<1x128xf32>
    tpu.vector_store %arg6[%c0_10, %c0_11], %45 {strides = array<i32>} : memref<5x128xf32, #tpu.memory_space<vmem>>, vector<1x128xf32>,
    %47 = vector.extract_strided_slice %36 {offsets = [0, 1], sizes = [128, 1], strides = [1, 1]} : vector<128x5xf32> to vector<128x1xf32>
    %48 = vector.broadcast %47 : vector<128x1xf32> to vector<128x128xf32>
    %49 = arith.mulf %35, %48 : vector<128x128xf32>
    %cst_12 = arith.constant dense<0.000000e+00> : vector<128xf32>
    %50 = vector.multi_reduction <add>, %49, %cst_12 [0] : vector<128x128xf32> to vector<128xf32>
    %51 = vector.shape_cast %50 : vector<128xf32> to vector<1x128xf32>
    %52 = vector.extract_strided_slice %37 {offsets = [1, 0], sizes = [1, 1], strides = [1, 1]} : vector<5x1xf32> to vector<1x1xf32>
    %53 = vector.broadcast %52 : vector<1x1xf32> to vector<1x128xf32>
    %54 = arith.addf %51, %53 : vector<1x128xf32>
    %c1 = arith.constant 1 : index
    %c0_13 = arith.constant 0 : index
    %55 = vector.load %arg6[%c1, %c0_13] : memref<5x128xf32, #tpu.memory_space<vmem>>, vector<1x128xf32>
    tpu.vector_store %arg6[%c1, %c0_13], %54 {strides = array<i32>} : memref<5x128xf32, #tpu.memory_space<vmem>>, vector<1x128xf32>,
    %56 = vector.extract_strided_slice %36 {offsets = [0, 2], sizes = [128, 1], strides = [1, 1]} : vector<128x5xf32> to vector<128x1xf32>
    %57 = vector.broadcast %56 : vector<128x1xf32> to vector<128x128xf32>
    %58 = arith.mulf %35, %57 : vector<128x128xf32>
    %cst_14 = arith.constant dense<0.000000e+00> : vector<128xf32>
    %59 = vector.multi_reduction <add>, %58, %cst_14 [0] : vector<128x128xf32> to vector<128xf32>
    %60 = vector.shape_cast %59 : vector<128xf32> to vector<1x128xf32>
    %61 = vector.extract_strided_slice %37 {offsets = [2, 0], sizes = [1, 1], strides = [1, 1]} : vector<5x1xf32> to vector<1x1xf32>
    %62 = vector.broadcast %61 : vector<1x1xf32> to vector<1x128xf32>
    %63 = arith.addf %60, %62 : vector<1x128xf32>
    %c2 = arith.constant 2 : index
    %c0_15 = arith.constant 0 : index
    %64 = vector.load %arg6[%c2, %c0_15] : memref<5x128xf32, #tpu.memory_space<vmem>>, vector<1x128xf32>
    tpu.vector_store %arg6[%c2, %c0_15], %63 {strides = array<i32>} : memref<5x128xf32, #tpu.memory_space<vmem>>, vector<1x128xf32>,
    %65 = vector.extract_strided_slice %36 {offsets = [0, 3], sizes = [128, 1], strides = [1, 1]} : vector<128x5xf32> to vector<128x1xf32>
    %66 = vector.broadcast %65 : vector<128x1xf32> to vector<128x128xf32>
    %67 = arith.mulf %35, %66 : vector<128x128xf32>
    %cst_16 = arith.constant dense<0.000000e+00> : vector<128xf32>
    %68 = vector.multi_reduction <add>, %67, %cst_16 [0] : vector<128x128xf32> to vector<128xf32>
    %69 = vector.shape_cast %68 : vector<128xf32> to vector<1x128xf32>
    %70 = vector.extract_strided_slice %37 {offsets = [3, 0], sizes = [1, 1], strides = [1, 1]} : vector<5x1xf32> to vector<1x1xf32>
    %71 = vector.broadcast %70 : vector<1x1xf32> to vector<1x128xf32>
    %72 = arith.addf %69, %71 : vector<1x128xf32>
    %c3 = arith.constant 3 : index
    %c0_17 = arith.constant 0 : index
    %73 = vector.load %arg6[%c3, %c0_17] : memref<5x128xf32, #tpu.memory_space<vmem>>, vector<1x128xf32>
    tpu.vector_store %arg6[%c3, %c0_17], %72 {strides = array<i32>} : memref<5x128xf32, #tpu.memory_space<vmem>>, vector<1x128xf32>,
    %74 = vector.extract_strided_slice %36 {offsets = [0, 4], sizes = [128, 1], strides = [1, 1]} : vector<128x5xf32> to vector<128x1xf32>
    %75 = vector.broadcast %74 : vector<128x1xf32> to vector<128x128xf32>
    %76 = arith.mulf %35, %75 : vector<128x128xf32>
    %cst_18 = arith.constant dense<0.000000e+00> : vector<128xf32>
    %77 = vector.multi_reduction <add>, %76, %cst_18 [0] : vector<128x128xf32> to vector<128xf32>
    %78 = vector.shape_cast %77 : vector<128xf32> to vector<1x128xf32>
    %79 = vector.extract_strided_slice %37 {offsets = [4, 0], sizes = [1, 1], strides = [1, 1]} : vector<5x1xf32> to vector<1x1xf32>
    %80 = vector.broadcast %79 : vector<1x1xf32> to vector<1x128xf32>
    %81 = arith.addf %78, %80 : vector<1x128xf32>
    %c4 = arith.constant 4 : index
    %c0_19 = arith.constant 0 : index
    %82 = vector.load %arg6[%c4, %c0_19] : memref<5x128xf32, #tpu.memory_space<vmem>>, vector<1x128xf32>
    tpu.vector_store %arg6[%c4, %c0_19], %81 {strides = array<i32>} : memref<5x128xf32, #tpu.memory_space<vmem>>, vector<1x128xf32>,
    return
  }
  func.func @transform_0(%arg0: i32) -> (i32, i32) {
    %c0_i32 = arith.constant 0 : i32
    %c0_i32_0 = arith.constant 0 : i32
    return %c0_i32, %arg0 : i32, i32
  }
  func.func @transform_1(%arg0: i32) -> (i32, i32) {
    %c0_i32 = arith.constant 0 : i32
    %c0_i32_0 = arith.constant 0 : i32
    %c0_i32_1 = arith.constant 0 : i32
    return %c0_i32, %c0_i32_0 : i32, i32
  }
  func.func @transform_2(%arg0: i32) -> (i32, i32) {
    %c0_i32 = arith.constant 0 : i32
    %c0_i32_0 = arith.constant 0 : i32
    %c0_i32_1 = arith.constant 0 : i32
    return %c0_i32, %c0_i32_0 : i32, i32
  }
  func.func @transform_3(%arg0: i32) -> (i32, i32) {
    %c0_i32 = arith.constant 0 : i32
    %c0_i32_0 = arith.constant 0 : i32
    %c0_i32_1 = arith.constant 0 : i32
    return %c0_i32, %c0_i32_0 : i32, i32
  }
  func.func @transform_4(%arg0: i32) -> (i32, i32) {
    %c0_i32 = arith.constant 0 : i32
    %c0_i32_0 = arith.constant 0 : i32
    %c0_i32_1 = arith.constant 0 : i32
    return %c0_i32, %c0_i32_0 : i32, i32
  }
  func.func @transform_5(%arg0: i32) -> (i32, i32) {
    %c0_i32 = arith.constant 0 : i32
    %c0_i32_0 = arith.constant 0 : i32
    return %c0_i32, %arg0 : i32, i32
  }
}

</mosaic_0001>

<llo_original>
// kernel: classification_model_forward.1
$region0: #{classification_model_forward.1}
  #allocation0 [shape = 'u32[]', space=smem, size = 0x4, offset = 0x4, fixed_abs, tag = 'smem constant byte address 0x4 - core index']
  #allocation1 [shape = 'u32[72,128]{1,0:T(1,128)}', space=vmem, size = 0x9000, scoped, tag = 'internal scratch']
  %s0 = inlined_call_operand.vmem [shape: f32[5,128], index: 0, kind: input, shape index: {}]
  %s1 = inlined_call_operand.vmem [shape: f32[128,5], index: 1, kind: input, shape index: {}]
  %s2 = inlined_call_operand.vmem [shape: f32[128,1], index: 2, kind: input, shape index: {}]
  %s3 = inlined_call_operand.vmem [shape: f32[128,5], index: 3, kind: input, shape index: {}]
  %s4 = inlined_call_operand.vmem [shape: f32[5,1], index: 4, kind: input, shape index: {}]
  %s5 = inlined_call_operand.vmem [shape: f32[5,128], index: 5, kind: output, shape index: {}]
  %s6 = sld [smem:[#allocation0]]
  $region30: #{classification_model_forward.1} parent=0
    _
  %s8 = ssub.s32 1, %s6
  %s9 = scalar_select 0, %s8, %s6
  // Predicated region
  $region2: #{classification_model_forward.1} parent=0 // pred_check
    _
  $region3: #{classification_model_forward.1} parent=0 // pred_check_branch
    %11 = sbr.rel (0) target = $region5
  $region4: #{classification_model_forward.1} parent=0 // pred_region
    _
  $region5: #{classification_model_forward.1} parent=0 // pred_fallthru
    _
  // Predicated region
  $region6: #{classification_model_forward.1} parent=0 // pred_check
    _
  $region7: #{classification_model_forward.1} parent=0 // pred_check_branch
    %13 = sbr.rel (0) target = $region9
  $region8: #{classification_model_forward.1} parent=0 // pred_region
    _
  $region9: #{classification_model_forward.1} parent=0 // pred_fallthru
    _
  // Predicated region
  $region10: #{classification_model_forward.1} parent=0 // pred_check
    _
  $region11: #{classification_model_forward.1} parent=0 // pred_check_branch
    %15 = sbr.rel (0) target = $region13
  $region12: #{classification_model_forward.1} parent=0 // pred_region
    _
  $region13: #{classification_model_forward.1} parent=0 // pred_fallthru
    _
  // Predicated region
  $region14: #{classification_model_forward.1} parent=0 // pred_check
    _
  $region15: #{classification_model_forward.1} parent=0 // pred_check_branch
    %17 = sbr.rel (0) target = $region17
  $region16: #{classification_model_forward.1} parent=0 // pred_region
    _
  $region17: #{classification_model_forward.1} parent=0 // pred_fallthru
    _
  // Predicated region
  $region18: #{classification_model_forward.1} parent=0 // pred_check
    _
  $region19: #{classification_model_forward.1} parent=0 // pred_check_branch
    %19 = sbr.rel (0) target = $region21
  $region20: #{classification_model_forward.1} parent=0 // pred_region
    _
  $region21: #{classification_model_forward.1} parent=0 // pred_fallthru
    _
  %v20 = vld [vmem:[%s0] sm:$0x1f]
  %v21 = vld [vmem:[%s1] sm:$0xff]
  %v22 = vld [vmem:[%s1 + $0x8] sm:$0xff]
  %v23 = vld [vmem:[%s1 + $0x10] sm:$0xff]
  %v24 = vld [vmem:[%s1 + $0x18] sm:$0xff]
  %v25 = vld [vmem:[%s1 + $0x20] sm:$0xff]
  %v26 = vld [vmem:[%s1 + $0x28] sm:$0xff]
  %v27 = vld [vmem:[%s1 + $0x30] sm:$0xff]
  %v28 = vld [vmem:[%s1 + $0x38] sm:$0xff]
  %v29 = vld [vmem:[%s1 + $0x40] sm:$0xff]
  %v30 = vld [vmem:[%s1 + $0x48] sm:$0xff]
  %v31 = vld [vmem:[%s1 + $0x50] sm:$0xff]
  %v32 = vld [vmem:[%s1 + $0x58] sm:$0xff]
  %v33 = vld [vmem:[%s1 + $0x60] sm:$0xff]
  %v34 = vld [vmem:[%s1 + $0x68] sm:$0xff]
  %v35 = vld [vmem:[%s1 + $0x70] sm:$0xff]
  %v36 = vld [vmem:[%s1 + $0x78] sm:$0xff]
  %38 = vset.pattern.permute.xlu0 0
  %39 = vperm.xlu0 %38, %v21
  %v40 = vpop.permute.xlu0 %39
  %43 = vset.pattern.permute.xlu0 0
  %44 = vperm.xlu0 %43, %v22
  %v45 = vpop.permute.xlu0 %44
  %48 = vset.pattern.permute.xlu0 0
  %49 = vperm.xlu0 %48, %v23
  %v50 = vpop.permute.xlu0 %49
  %53 = vset.pattern.permute.xlu0 0
  %54 = vperm.xlu0 %53, %v24
  %v55 = vpop.permute.xlu0 %54
  %58 = vset.pattern.permute.xlu0 0
  %59 = vperm.xlu0 %58, %v25
  %v60 = vpop.permute.xlu0 %59
  %63 = vset.pattern.permute.xlu0 0
  %64 = vperm.xlu0 %63, %v26
  %v65 = vpop.permute.xlu0 %64
  %68 = vset.pattern.permute.xlu0 0
  %69 = vperm.xlu0 %68, %v27
  %v70 = vpop.permute.xlu0 %69
  %73 = vset.pattern.permute.xlu0 0
  %74 = vperm.xlu0 %73, %v28
  %v75 = vpop.permute.xlu0 %74
  %78 = vset.pattern.permute.xlu0 0
  %79 = vperm.xlu0 %78, %v29
  %v80 = vpop.permute.xlu0 %79
  %83 = vset.pattern.permute.xlu0 0
  %84 = vperm.xlu0 %83, %v30
  %v85 = vpop.permute.xlu0 %84
  %88 = vset.pattern.permute.xlu0 0
  %89 = vperm.xlu0 %88, %v31
  %v90 = vpop.permute.xlu0 %89
  %93 = vset.pattern.permute.xlu0 0
  %94 = vperm.xlu0 %93, %v32
  %v95 = vpop.permute.xlu0 %94
  %98 = vset.pattern.permute.xlu0 0
  %99 = vperm.xlu0 %98, %v33
  %v100 = vpop.permute.xlu0 %99
  %103 = vset.pattern.permute.xlu0 0
  %104 = vperm.xlu0 %103, %v34
  %v105 = vpop.permute.xlu0 %104
  %108 = vset.pattern.permute.xlu0 0
  %109 = vperm.xlu0 %108, %v35
  %v110 = vpop.permute.xlu0 %109
  %113 = vset.pattern.permute.xlu0 0
  %114 = vperm.xlu0 %113, %v36
  %v115 = vpop.permute.xlu0 %114
  %v117 = vperm.slane %v20, 0
  %v118 = vmul.f32 %v40, %v117
  %v119 = vmul.f32 %v45, %v117
  %v120 = vmul.f32 %v50, %v117
  %v121 = vmul.f32 %v55, %v117
  %v122 = vmul.f32 %v60, %v117
  %v123 = vmul.f32 %v65, %v117
  %v124 = vmul.f32 %v70, %v117
  %v125 = vmul.f32 %v75, %v117
  %v126 = vmul.f32 %v80, %v117
  %v127 = vmul.f32 %v85, %v117
  %v128 = vmul.f32 %v90, %v117
  %v129 = vmul.f32 %v95, %v117
  %v130 = vmul.f32 %v100, %v117
  %v131 = vmul.f32 %v105, %v117
  %v132 = vmul.f32 %v110, %v117
  %v133 = vmul.f32 %v115, %v117
  %134 = vset.pattern.permute.xlu0 1
  %135 = vperm.xlu0 %134, %v21
  %v136 = vpop.permute.xlu0 %135
  %138 = vset.pattern.permute.xlu0 1
  %139 = vperm.xlu0 %138, %v22
  %v140 = vpop.permute.xlu0 %139
  %142 = vset.pattern.permute.xlu0 1
  %143 = vperm.xlu0 %142, %v23
  %v144 = vpop.permute.xlu0 %143
  %146 = vset.pattern.permute.xlu0 1
  %147 = vperm.xlu0 %146, %v24
  %v148 = vpop.permute.xlu0 %147
  %150 = vset.pattern.permute.xlu0 1
  %151 = vperm.xlu0 %150, %v25
  %v152 = vpop.permute.xlu0 %151
  %154 = vset.pattern.permute.xlu0 1
  %155 = vperm.xlu0 %154, %v26
  %v156 = vpop.permute.xlu0 %155
  %158 = vset.pattern.permute.xlu0 1
  %159 = vperm.xlu0 %158, %v27
  %v160 = vpop.permute.xlu0 %159
  %162 = vset.pattern.permute.xlu0 1
  %163 = vperm.xlu0 %162, %v28
  %v164 = vpop.permute.xlu0 %163
  %166 = vset.pattern.permute.xlu0 1
  %167 = vperm.xlu0 %166, %v29
  %v168 = vpop.permute.xlu0 %167
  %170 = vset.pattern.permute.xlu0 1
  %171 = vperm.xlu0 %170, %v30
  %v172 = vpop.permute.xlu0 %171
  %174 = vset.pattern.permute.xlu0 1
  %175 = vperm.xlu0 %174, %v31
  %v176 = vpop.permute.xlu0 %175
  %178 = vset.pattern.permute.xlu0 1
  %179 = vperm.xlu0 %178, %v32
  %v180 = vpop.permute.xlu0 %179
  %182 = vset.pattern.permute.xlu0 1
  %183 = vperm.xlu0 %182, %v33
  %v184 = vpop.permute.xlu0 %183
  %186 = vset.pattern.permute.xlu0 1
  %187 = vperm.xlu0 %186, %v34
  %v188 = vpop.permute.xlu0 %187
  %190 = vset.pattern.permute.xlu0 1
  %191 = vperm.xlu0 %190, %v35
  %v192 = vpop.permute.xlu0 %191
  %194 = vset.pattern.permute.xlu0 1
  %195 = vperm.xlu0 %194, %v36
  %v196 = vpop.permute.xlu0 %195
  %v198 = vperm.slane %v20, 1
  %v199 = vmul.f32 %v136, %v198
  %v200 = vmul.f32 %v140, %v198
  %v201 = vmul.f32 %v144, %v198
  %v202 = vmul.f32 %v148, %v198
  %v203 = vmul.f32 %v152, %v198
  %v204 = vmul.f32 %v156, %v198
  %v205 = vmul.f32 %v160, %v198
  %v206 = vmul.f32 %v164, %v198
  %v207 = vmul.f32 %v168, %v198
  %v208 = vmul.f32 %v172, %v198
  %v209 = vmul.f32 %v176, %v198
  %v210 = vmul.f32 %v180, %v198
  %v211 = vmul.f32 %v184, %v198
  %v212 = vmul.f32 %v188, %v198
  %v213 = vmul.f32 %v192, %v198
  %v214 = vmul.f32 %v196, %v198
  %v215 = vadd.f32 %v118, %v199
  %v216 = vadd.f32 %v119, %v200
  %v217 = vadd.f32 %v120, %v201
  %v218 = vadd.f32 %v121, %v202
  %v219 = vadd.f32 %v122, %v203
  %v220 = vadd.f32 %v123, %v204
  %v221 = vadd.f32 %v124, %v205
  %v222 = vadd.f32 %v125, %v206
  %v223 = vadd.f32 %v126, %v207
  %v224 = vadd.f32 %v127, %v208
  %v225 = vadd.f32 %v128, %v209
  %v226 = vadd.f32 %v129, %v210
  %v227 = vadd.f32 %v130, %v211
  %v228 = vadd.f32 %v131, %v212
  %v229 = vadd.f32 %v132, %v213
  %v230 = vadd.f32 %v133, %v214
  %231 = vset.pattern.permute.xlu0 2
  %232 = vperm.xlu0 %231, %v21
  %v233 = vpop.permute.xlu0 %232
  %235 = vset.pattern.permute.xlu0 2
  %236 = vperm.xlu0 %235, %v22
  %v237 = vpop.permute.xlu0 %236
  %239 = vset.pattern.permute.xlu0 2
  %240 = vperm.xlu0 %239, %v23
  %v241 = vpop.permute.xlu0 %240
  %243 = vset.pattern.permute.xlu0 2
  %244 = vperm.xlu0 %243, %v24
  %v245 = vpop.permute.xlu0 %244
  %247 = vset.pattern.permute.xlu0 2
  %248 = vperm.xlu0 %247, %v25
  %v249 = vpop.permute.xlu0 %248
  %251 = vset.pattern.permute.xlu0 2
  %252 = vperm.xlu0 %251, %v26
  %v253 = vpop.permute.xlu0 %252
  %255 = vset.pattern.permute.xlu0 2
  %256 = vperm.xlu0 %255, %v27
  %v257 = vpop.permute.xlu0 %256
  %259 = vset.pattern.permute.xlu0 2
  %260 = vperm.xlu0 %259, %v28
  %v261 = vpop.permute.xlu0 %260
  %263 = vset.pattern.permute.xlu0 2
  %264 = vperm.xlu0 %263, %v29
  %v265 = vpop.permute.xlu0 %264
  %267 = vset.pattern.permute.xlu0 2
  %268 = vperm.xlu0 %267, %v30
  %v269 = vpop.permute.xlu0 %268
  %271 = vset.pattern.permute.xlu0 2
  %272 = vperm.xlu0 %271, %v31
  %v273 = vpop.permute.xlu0 %272
  %275 = vset.pattern.permute.xlu0 2
  %276 = vperm.xlu0 %275, %v32
  %v277 = vpop.permute.xlu0 %276
  %279 = vset.pattern.permute.xlu0 2
  %280 = vperm.xlu0 %279, %v33
  %v281 = vpop.permute.xlu0 %280
  %283 = vset.pattern.permute.xlu0 2
  %284 = vperm.xlu0 %283, %v34
  %v285 = vpop.permute.xlu0 %284
  %287 = vset.pattern.permute.xlu0 2
  %288 = vperm.xlu0 %287, %v35
  %v289 = vpop.permute.xlu0 %288
  %291 = vset.pattern.permute.xlu0 2
  %292 = vperm.xlu0 %291, %v36
  %v293 = vpop.permute.xlu0 %292
  %v295 = vperm.slane %v20, 2
  %v296 = vmul.f32 %v233, %v295
  %v297 = vmul.f32 %v237, %v295
  %v298 = vmul.f32 %v241, %v295
  %v299 = vmul.f32 %v245, %v295
  %v300 = vmul.f32 %v249, %v295
  %v301 = vmul.f32 %v253, %v295
  %v302 = vmul.f32 %v257, %v295
  %v303 = vmul.f32 %v261, %v295
  %v304 = vmul.f32 %v265, %v295
  %v305 = vmul.f32 %v269, %v295
  %v306 = vmul.f32 %v273, %v295
  %v307 = vmul.f32 %v277, %v295
  %v308 = vmul.f32 %v281, %v295
  %v309 = vmul.f32 %v285, %v295
  %v310 = vmul.f32 %v289, %v295
  %v311 = vmul.f32 %v293, %v295
  %v312 = vadd.f32 %v215, %v296
  %v313 = vadd.f32 %v216, %v297
  %v314 = vadd.f32 %v217, %v298
  %v315 = vadd.f32 %v218, %v299
  %v316 = vadd.f32 %v219, %v300
  %v317 = vadd.f32 %v220, %v301
  %v318 = vadd.f32 %v221, %v302
  %v319 = vadd.f32 %v222, %v303
  %v320 = vadd.f32 %v223, %v304
  %v321 = vadd.f32 %v224, %v305
  %v322 = vadd.f32 %v225, %v306
  %v323 = vadd.f32 %v226, %v307
  %v324 = vadd.f32 %v227, %v308
  %v325 = vadd.f32 %v228, %v309
  %v326 = vadd.f32 %v229, %v310
  %v327 = vadd.f32 %v230, %v311
  %328 = vset.pattern.permute.xlu0 3
  %329 = vperm.xlu0 %328, %v21
  %v330 = vpop.permute.xlu0 %329
  %332 = vset.pattern.permute.xlu0 3
  %333 = vperm.xlu0 %332, %v22
  %v334 = vpop.permute.xlu0 %333
  %336 = vset.pattern.permute.xlu0 3
  %337 = vperm.xlu0 %336, %v23
  %v338 = vpop.permute.xlu0 %337
  %340 = vset.pattern.permute.xlu0 3
  %341 = vperm.xlu0 %340, %v24
  %v342 = vpop.permute.xlu0 %341
  %344 = vset.pattern.permute.xlu0 3
  %345 = vperm.xlu0 %344, %v25
  %v346 = vpop.permute.xlu0 %345
  %348 = vset.pattern.permute.xlu0 3
  %349 = vperm.xlu0 %348, %v26
  %v350 = vpop.permute.xlu0 %349
  %352 = vset.pattern.permute.xlu0 3
  %353 = vperm.xlu0 %352, %v27
  %v354 = vpop.permute.xlu0 %353
  %356 = vset.pattern.permute.xlu0 3
  %357 = vperm.xlu0 %356, %v28
  %v358 = vpop.permute.xlu0 %357
  %360 = vset.pattern.permute.xlu0 3
  %361 = vperm.xlu0 %360, %v29
  %v362 = vpop.permute.xlu0 %361
  %364 = vset.pattern.permute.xlu0 3
  %365 = vperm.xlu0 %364, %v30
  %v366 = vpop.permute.xlu0 %365
  %368 = vset.pattern.permute.xlu0 3
  %369 = vperm.xlu0 %368, %v31
  %v370 = vpop.permute.xlu0 %369
  %372 = vset.pattern.permute.xlu0 3
  %373 = vperm.xlu0 %372, %v32
  %v374 = vpop.permute.xlu0 %373
  %376 = vset.pattern.permute.xlu0 3
  %377 = vperm.xlu0 %376, %v33
  %v378 = vpop.permute.xlu0 %377
  %380 = vset.pattern.permute.xlu0 3
  %381 = vperm.xlu0 %380, %v34
  %v382 = vpop.permute.xlu0 %381
  %384 = vset.pattern.permute.xlu0 3
  %385 = vperm.xlu0 %384, %v35
  %v386 = vpop.permute.xlu0 %385
  %388 = vset.pattern.permute.xlu0 3
  %389 = vperm.xlu0 %388, %v36
  %v390 = vpop.permute.xlu0 %389
  %v392 = vperm.slane %v20, 3
  %v393 = vmul.f32 %v330, %v392
  %v394 = vmul.f32 %v334, %v392
  %v395 = vmul.f32 %v338, %v392
  %v396 = vmul.f32 %v342, %v392
  %v397 = vmul.f32 %v346, %v392
  %v398 = vmul.f32 %v350, %v392
  %v399 = vmul.f32 %v354, %v392
  %v400 = vmul.f32 %v358, %v392
  %v401 = vmul.f32 %v362, %v392
  %v402 = vmul.f32 %v366, %v392
  %v403 = vmul.f32 %v370, %v392
  %v404 = vmul.f32 %v374, %v392
  %v405 = vmul.f32 %v378, %v392
  %v406 = vmul.f32 %v382, %v392
  %v407 = vmul.f32 %v386, %v392
  %v408 = vmul.f32 %v390, %v392
  %v409 = vadd.f32 %v312, %v393
  %v410 = vadd.f32 %v313, %v394
  %v411 = vadd.f32 %v314, %v395
  %v412 = vadd.f32 %v315, %v396
  %v413 = vadd.f32 %v316, %v397
  %v414 = vadd.f32 %v317, %v398
  %v415 = vadd.f32 %v318, %v399
  %v416 = vadd.f32 %v319, %v400
  %v417 = vadd.f32 %v320, %v401
  %v418 = vadd.f32 %v321, %v402
  %v419 = vadd.f32 %v322, %v403
  %v420 = vadd.f32 %v323, %v404
  %v421 = vadd.f32 %v324, %v405
  %v422 = vadd.f32 %v325, %v406
  %v423 = vadd.f32 %v326, %v407
  %v424 = vadd.f32 %v327, %v408
  %425 = vset.pattern.permute.xlu0 4
  %426 = vperm.xlu0 %425, %v21
  %v427 = vpop.permute.xlu0 %426
  %429 = vset.pattern.permute.xlu0 4
  %430 = vperm.xlu0 %429, %v22
  %v431 = vpop.permute.xlu0 %430
  %433 = vset.pattern.permute.xlu0 4
  %434 = vperm.xlu0 %433, %v23
  %v435 = vpop.permute.xlu0 %434
  %437 = vset.pattern.permute.xlu0 4
  %438 = vperm.xlu0 %437, %v24
  %v439 = vpop.permute.xlu0 %438
  %441 = vset.pattern.permute.xlu0 4
  %442 = vperm.xlu0 %441, %v25
  %v443 = vpop.permute.xlu0 %442
  %445 = vset.pattern.permute.xlu0 4
  %446 = vperm.xlu0 %445, %v26
  %v447 = vpop.permute.xlu0 %446
  %449 = vset.pattern.permute.xlu0 4
  %450 = vperm.xlu0 %449, %v27
  %v451 = vpop.permute.xlu0 %450
  %453 = vset.pattern.permute.xlu0 4
  %454 = vperm.xlu0 %453, %v28
  %v455 = vpop.permute.xlu0 %454
  %457 = vset.pattern.permute.xlu0 4
  %458 = vperm.xlu0 %457, %v29
  %v459 = vpop.permute.xlu0 %458
  %461 = vset.pattern.permute.xlu0 4
  %462 = vperm.xlu0 %461, %v30
  %v463 = vpop.permute.xlu0 %462
  %465 = vset.pattern.permute.xlu0 4
  %466 = vperm.xlu0 %465, %v31
  %v467 = vpop.permute.xlu0 %466
  %469 = vset.pattern.permute.xlu0 4
  %470 = vperm.xlu0 %469, %v32
  %v471 = vpop.permute.xlu0 %470
  %473 = vset.pattern.permute.xlu0 4
  %474 = vperm.xlu0 %473, %v33
  %v475 = vpop.permute.xlu0 %474
  %477 = vset.pattern.permute.xlu0 4
  %478 = vperm.xlu0 %477, %v34
  %v479 = vpop.permute.xlu0 %478
  %481 = vset.pattern.permute.xlu0 4
  %482 = vperm.xlu0 %481, %v35
  %v483 = vpop.permute.xlu0 %482
  %485 = vset.pattern.permute.xlu0 4
  %486 = vperm.xlu0 %485, %v36
  %v487 = vpop.permute.xlu0 %486
  %v489 = vperm.slane %v20, 4
  %v490 = vmul.f32 %v427, %v489
  %v491 = vmul.f32 %v431, %v489
  %v492 = vmul.f32 %v435, %v489
  %v493 = vmul.f32 %v439, %v489
  %v494 = vmul.f32 %v443, %v489
  %v495 = vmul.f32 %v447, %v489
  %v496 = vmul.f32 %v451, %v489
  %v497 = vmul.f32 %v455, %v489
  %v498 = vmul.f32 %v459, %v489
  %v499 = vmul.f32 %v463, %v489
  %v500 = vmul.f32 %v467, %v489
  %v501 = vmul.f32 %v471, %v489
  %v502 = vmul.f32 %v475, %v489
  %v503 = vmul.f32 %v479, %v489
  %v504 = vmul.f32 %v483, %v489
  %v505 = vmul.f32 %v487, %v489
  %v506 = vadd.f32 %v409, %v490
  %v507 = vadd.f32 %v410, %v491
  %v508 = vadd.f32 %v411, %v492
  %v509 = vadd.f32 %v412, %v493
  %v510 = vadd.f32 %v413, %v494
  %v511 = vadd.f32 %v414, %v495
  %v512 = vadd.f32 %v415, %v496
  %v513 = vadd.f32 %v416, %v497
  %v514 = vadd.f32 %v417, %v498
  %v515 = vadd.f32 %v418, %v499
  %v516 = vadd.f32 %v419, %v500
  %v517 = vadd.f32 %v420, %v501
  %v518 = vadd.f32 %v421, %v502
  %v519 = vadd.f32 %v422, %v503
  %v520 = vadd.f32 %v423, %v504
  %v521 = vadd.f32 %v424, %v505
  %v522 = vld [vmem:[%s2] sm:$0xff]
  %v523 = vld [vmem:[%s2 + $0x8] sm:$0xff]
  %v524 = vld [vmem:[%s2 + $0x10] sm:$0xff]
  %v525 = vld [vmem:[%s2 + $0x18] sm:$0xff]
  %v526 = vld [vmem:[%s2 + $0x20] sm:$0xff]
  %v527 = vld [vmem:[%s2 + $0x28] sm:$0xff]
  %v528 = vld [vmem:[%s2 + $0x30] sm:$0xff]
  %v529 = vld [vmem:[%s2 + $0x38] sm:$0xff]
  %v530 = vld [vmem:[%s2 + $0x40] sm:$0xff]
  %v531 = vld [vmem:[%s2 + $0x48] sm:$0xff]
  %v532 = vld [vmem:[%s2 + $0x50] sm:$0xff]
  %v533 = vld [vmem:[%s2 + $0x58] sm:$0xff]
  %v534 = vld [vmem:[%s2 + $0x60] sm:$0xff]
  %v535 = vld [vmem:[%s2 + $0x68] sm:$0xff]
  %v536 = vld [vmem:[%s2 + $0x70] sm:$0xff]
  %v537 = vld [vmem:[%s2 + $0x78] sm:$0xff]
  %539 = vset.pattern.permute.xlu0 0
  %540 = vperm.xlu0 %539, %v522
  %v541 = vpop.permute.xlu0 %540
  %544 = vset.pattern.permute.xlu0 0
  %545 = vperm.xlu0 %544, %v523
  %v546 = vpop.permute.xlu0 %545
  %549 = vset.pattern.permute.xlu0 0
  %550 = vperm.xlu0 %549, %v524
  %v551 = vpop.permute.xlu0 %550
  %554 = vset.pattern.permute.xlu0 0
  %555 = vperm.xlu0 %554, %v525
  %v556 = vpop.permute.xlu0 %555
  %559 = vset.pattern.permute.xlu0 0
  %560 = vperm.xlu0 %559, %v526
  %v561 = vpop.permute.xlu0 %560
  %564 = vset.pattern.permute.xlu0 0
  %565 = vperm.xlu0 %564, %v527
  %v566 = vpop.permute.xlu0 %565
  %569 = vset.pattern.permute.xlu0 0
  %570 = vperm.xlu0 %569, %v528
  %v571 = vpop.permute.xlu0 %570
  %574 = vset.pattern.permute.xlu0 0
  %575 = vperm.xlu0 %574, %v529
  %v576 = vpop.permute.xlu0 %575
  %579 = vset.pattern.permute.xlu0 0
  %580 = vperm.xlu0 %579, %v530
  %v581 = vpop.permute.xlu0 %580
  %584 = vset.pattern.permute.xlu0 0
  %585 = vperm.xlu0 %584, %v531
  %v586 = vpop.permute.xlu0 %585
  %589 = vset.pattern.permute.xlu0 0
  %590 = vperm.xlu0 %589, %v532
  %v591 = vpop.permute.xlu0 %590
  %594 = vset.pattern.permute.xlu0 0
  %595 = vperm.xlu0 %594, %v533
  %v596 = vpop.permute.xlu0 %595
  %599 = vset.pattern.permute.xlu0 0
  %600 = vperm.xlu0 %599, %v534
  %v601 = vpop.permute.xlu0 %600
  %604 = vset.pattern.permute.xlu0 0
  %605 = vperm.xlu0 %604, %v535
  %v606 = vpop.permute.xlu0 %605
  %609 = vset.pattern.permute.xlu0 0
  %610 = vperm.xlu0 %609, %v536
  %v611 = vpop.permute.xlu0 %610
  %614 = vset.pattern.permute.xlu0 0
  %615 = vperm.xlu0 %614, %v537
  %v616 = vpop.permute.xlu0 %615
  %v618 = vadd.f32 %v506, %v541
  %v619 = vadd.f32 %v507, %v546
  %v620 = vadd.f32 %v508, %v551
  %v621 = vadd.f32 %v509, %v556
  %v622 = vadd.f32 %v510, %v561
  %v623 = vadd.f32 %v511, %v566
  %v624 = vadd.f32 %v512, %v571
  %v625 = vadd.f32 %v513, %v576
  %v626 = vadd.f32 %v514, %v581
  %v627 = vadd.f32 %v515, %v586
  %v628 = vadd.f32 %v516, %v591
  %v629 = vadd.f32 %v517, %v596
  %v630 = vadd.f32 %v518, %v601
  %v631 = vadd.f32 %v519, %v606
  %v632 = vadd.f32 %v520, %v611
  %v633 = vadd.f32 %v521, %v616
  %v634 = vmax.f32 %v618, 0.0
  %v635 = vmax.f32 %v619, 0.0
  %v636 = vmax.f32 %v620, 0.0
  %v637 = vmax.f32 %v621, 0.0
  %v638 = vmax.f32 %v622, 0.0
  %v639 = vmax.f32 %v623, 0.0
  %v640 = vmax.f32 %v624, 0.0
  %v641 = vmax.f32 %v625, 0.0
  %v642 = vmax.f32 %v626, 0.0
  %v643 = vmax.f32 %v627, 0.0
  %v644 = vmax.f32 %v628, 0.0
  %v645 = vmax.f32 %v629, 0.0
  %v646 = vmax.f32 %v630, 0.0
  %v647 = vmax.f32 %v631, 0.0
  %v648 = vmax.f32 %v632, 0.0
  %v649 = vmax.f32 %v633, 0.0
  %v650 = vld [vmem:[%s3] sm:$0xff]
  %v651 = vld [vmem:[%s3 + $0x8] sm:$0xff]
  %v652 = vld [vmem:[%s3 + $0x10] sm:$0xff]
  %v653 = vld [vmem:[%s3 + $0x18] sm:$0xff]
  %v654 = vld [vmem:[%s3 + $0x20] sm:$0xff]
  %v655 = vld [vmem:[%s3 + $0x28] sm:$0xff]
  %v656 = vld [vmem:[%s3 + $0x30] sm:$0xff]
  %v657 = vld [vmem:[%s3 + $0x38] sm:$0xff]
  %v658 = vld [vmem:[%s3 + $0x40] sm:$0xff]
  %v659 = vld [vmem:[%s3 + $0x48] sm:$0xff]
  %v660 = vld [vmem:[%s3 + $0x50] sm:$0xff]
  %v661 = vld [vmem:[%s3 + $0x58] sm:$0xff]
  %v662 = vld [vmem:[%s3 + $0x60] sm:$0xff]
  %v663 = vld [vmem:[%s3 + $0x68] sm:$0xff]
  %v664 = vld [vmem:[%s3 + $0x70] sm:$0xff]
  %v665 = vld [vmem:[%s3 + $0x78] sm:$0xff]
  %v666 = vld [vmem:[%s4] sm:$0x1f]
  %668 = vset.pattern.permute.xlu0 0
  %669 = vperm.xlu0 %668, %v650
  %v670 = vpop.permute.xlu0 %669
  %673 = vset.pattern.permute.xlu0 0
  %674 = vperm.xlu0 %673, %v651
  %v675 = vpop.permute.xlu0 %674
  %678 = vset.pattern.permute.xlu0 0
  %679 = vperm.xlu0 %678, %v652
  %v680 = vpop.permute.xlu0 %679
  %683 = vset.pattern.permute.xlu0 0
  %684 = vperm.xlu0 %683, %v653
  %v685 = vpop.permute.xlu0 %684
  %688 = vset.pattern.permute.xlu0 0
  %689 = vperm.xlu0 %688, %v654
  %v690 = vpop.permute.xlu0 %689
  %693 = vset.pattern.permute.xlu0 0
  %694 = vperm.xlu0 %693, %v655
  %v695 = vpop.permute.xlu0 %694
  %698 = vset.pattern.permute.xlu0 0
  %699 = vperm.xlu0 %698, %v656
  %v700 = vpop.permute.xlu0 %699
  %703 = vset.pattern.permute.xlu0 0
  %704 = vperm.xlu0 %703, %v657
  %v705 = vpop.permute.xlu0 %704
  %708 = vset.pattern.permute.xlu0 0
  %709 = vperm.xlu0 %708, %v658
  %v710 = vpop.permute.xlu0 %709
  %713 = vset.pattern.permute.xlu0 0
  %714 = vperm.xlu0 %713, %v659
  %v715 = vpop.permute.xlu0 %714
  %718 = vset.pattern.permute.xlu0 0
  %719 = vperm.xlu0 %718, %v660
  %v720 = vpop.permute.xlu0 %719
  %723 = vset.pattern.permute.xlu0 0
  %724 = vperm.xlu0 %723, %v661
  %v725 = vpop.permute.xlu0 %724
  %728 = vset.pattern.permute.xlu0 0
  %729 = vperm.xlu0 %728, %v662
  %v730 = vpop.permute.xlu0 %729
  %733 = vset.pattern.permute.xlu0 0
  %734 = vperm.xlu0 %733, %v663
  %v735 = vpop.permute.xlu0 %734
  %738 = vset.pattern.permute.xlu0 0
  %739 = vperm.xlu0 %738, %v664
  %v740 = vpop.permute.xlu0 %739
  %743 = vset.pattern.permute.xlu0 0
  %744 = vperm.xlu0 %743, %v665
  %v745 = vpop.permute.xlu0 %744
  %v747 = vmul.f32 %v634, %v670
  %v748 = vmul.f32 %v635, %v675
  %v749 = vmul.f32 %v636, %v680
  %v750 = vmul.f32 %v637, %v685
  %v751 = vmul.f32 %v638, %v690
  %v752 = vmul.f32 %v639, %v695
  %v753 = vmul.f32 %v640, %v700
  %v754 = vmul.f32 %v641, %v705
  %v755 = vmul.f32 %v642, %v710
  %v756 = vmul.f32 %v643, %v715
  %v757 = vmul.f32 %v644, %v720
  %v758 = vmul.f32 %v645, %v725
  %v759 = vmul.f32 %v646, %v730
  %v760 = vmul.f32 %v647, %v735
  %v761 = vmul.f32 %v648, %v740
  %v762 = vmul.f32 %v649, %v745
  %v763 = vadd.f32 %v747, %v748
  %v764 = vadd.f32 %v763, %v749
  %v765 = vadd.f32 %v764, %v750
  %v766 = vadd.f32 %v765, %v751
  %v767 = vadd.f32 %v766, %v752
  %v768 = vadd.f32 %v767, %v753
  %v769 = vadd.f32 %v768, %v754
  %v770 = vadd.f32 %v769, %v755
  %v771 = vadd.f32 %v770, %v756
  %v772 = vadd.f32 %v771, %v757
  %v773 = vadd.f32 %v772, %v758
  %v774 = vadd.f32 %v773, %v759
  %v775 = vadd.f32 %v774, %v760
  %v776 = vadd.f32 %v775, %v761
  %v777 = vadd.f32 %v776, %v762
  %v778 = vrot.slane %v777, 4
  %v779 = vadd.f32 %v777, %v778
  %v780 = vrot.slane %v779, 2
  %v781 = vadd.f32 %v779, %v780
  %v782 = vrot.slane %v781, 1
  %v783 = vadd.f32 %v781, %v782
  %785 = vset.pattern.permute.xlu0 0
  %786 = vperm.xlu0 %785, %v666
  %v787 = vpop.permute.xlu0 %786
  %v789 = vadd.f32 %v783, %v787
  %790 = vst [vmem:[%s5] sm:$0x1] %v789
  %791 = vset.pattern.permute.xlu0 1
  %792 = vperm.xlu0 %791, %v650
  %v793 = vpop.permute.xlu0 %792
  %795 = vset.pattern.permute.xlu0 1
  %796 = vperm.xlu0 %795, %v651
  %v797 = vpop.permute.xlu0 %796
  %799 = vset.pattern.permute.xlu0 1
  %800 = vperm.xlu0 %799, %v652
  %v801 = vpop.permute.xlu0 %800
  %803 = vset.pattern.permute.xlu0 1
  %804 = vperm.xlu0 %803, %v653
  %v805 = vpop.permute.xlu0 %804
  %807 = vset.pattern.permute.xlu0 1
  %808 = vperm.xlu0 %807, %v654
  %v809 = vpop.permute.xlu0 %808
  %811 = vset.pattern.permute.xlu0 1
  %812 = vperm.xlu0 %811, %v655
  %v813 = vpop.permute.xlu0 %812
  %815 = vset.pattern.permute.xlu0 1
  %816 = vperm.xlu0 %815, %v656
  %v817 = vpop.permute.xlu0 %816
  %819 = vset.pattern.permute.xlu0 1
  %820 = vperm.xlu0 %819, %v657
  %v821 = vpop.permute.xlu0 %820
  %823 = vset.pattern.permute.xlu0 1
  %824 = vperm.xlu0 %823, %v658
  %v825 = vpop.permute.xlu0 %824
  %827 = vset.pattern.permute.xlu0 1
  %828 = vperm.xlu0 %827, %v659
  %v829 = vpop.permute.xlu0 %828
  %831 = vset.pattern.permute.xlu0 1
  %832 = vperm.xlu0 %831, %v660
  %v833 = vpop.permute.xlu0 %832
  %835 = vset.pattern.permute.xlu0 1
  %836 = vperm.xlu0 %835, %v661
  %v837 = vpop.permute.xlu0 %836
  %839 = vset.pattern.permute.xlu0 1
  %840 = vperm.xlu0 %839, %v662
  %v841 = vpop.permute.xlu0 %840
  %843 = vset.pattern.permute.xlu0 1
  %844 = vperm.xlu0 %843, %v663
  %v845 = vpop.permute.xlu0 %844
  %847 = vset.pattern.permute.xlu0 1
  %848 = vperm.xlu0 %847, %v664
  %v849 = vpop.permute.xlu0 %848
  %851 = vset.pattern.permute.xlu0 1
  %852 = vperm.xlu0 %851, %v665
  %v853 = vpop.permute.xlu0 %852
  %v855 = vmul.f32 %v634, %v793
  %v856 = vmul.f32 %v635, %v797
  %v857 = vmul.f32 %v636, %v801
  %v858 = vmul.f32 %v637, %v805
  %v859 = vmul.f32 %v638, %v809
  %v860 = vmul.f32 %v639, %v813
  %v861 = vmul.f32 %v640, %v817
  %v862 = vmul.f32 %v641, %v821
  %v863 = vmul.f32 %v642, %v825
  %v864 = vmul.f32 %v643, %v829
  %v865 = vmul.f32 %v644, %v833
  %v866 = vmul.f32 %v645, %v837
  %v867 = vmul.f32 %v646, %v841
  %v868 = vmul.f32 %v647, %v845
  %v869 = vmul.f32 %v648, %v849
  %v870 = vmul.f32 %v649, %v853
  %v871 = vadd.f32 %v855, %v856
  %v872 = vadd.f32 %v871, %v857
  %v873 = vadd.f32 %v872, %v858
  %v874 = vadd.f32 %v873, %v859
  %v875 = vadd.f32 %v874, %v860
  %v876 = vadd.f32 %v875, %v861
  %v877 = vadd.f32 %v876, %v862
  %v878 = vadd.f32 %v877, %v863
  %v879 = vadd.f32 %v878, %v864
  %v880 = vadd.f32 %v879, %v865
  %v881 = vadd.f32 %v880, %v866
  %v882 = vadd.f32 %v881, %v867
  %v883 = vadd.f32 %v882, %v868
  %v884 = vadd.f32 %v883, %v869
  %v885 = vadd.f32 %v884, %v870
  %v886 = vrot.slane %v885, 4
  %v887 = vadd.f32 %v885, %v886
  %v888 = vrot.slane %v887, 2
  %v889 = vadd.f32 %v887, %v888
  %v890 = vrot.slane %v889, 1
  %v891 = vadd.f32 %v889, %v890
  %v892 = vadd.f32 %v891, %v787
  %893 = vst [vmem:[%s5] sm:$0x2] %v892
  %894 = vset.pattern.permute.xlu0 2
  %895 = vperm.xlu0 %894, %v650
  %v896 = vpop.permute.xlu0 %895
  %898 = vset.pattern.permute.xlu0 2
  %899 = vperm.xlu0 %898, %v651
  %v900 = vpop.permute.xlu0 %899
  %902 = vset.pattern.permute.xlu0 2
  %903 = vperm.xlu0 %902, %v652
  %v904 = vpop.permute.xlu0 %903
  %906 = vset.pattern.permute.xlu0 2
  %907 = vperm.xlu0 %906, %v653
  %v908 = vpop.permute.xlu0 %907
  %910 = vset.pattern.permute.xlu0 2
  %911 = vperm.xlu0 %910, %v654
  %v912 = vpop.permute.xlu0 %911
  %914 = vset.pattern.permute.xlu0 2
  %915 = vperm.xlu0 %914, %v655
  %v916 = vpop.permute.xlu0 %915
  %918 = vset.pattern.permute.xlu0 2
  %919 = vperm.xlu0 %918, %v656
  %v920 = vpop.permute.xlu0 %919
  %922 = vset.pattern.permute.xlu0 2
  %923 = vperm.xlu0 %922, %v657
  %v924 = vpop.permute.xlu0 %923
  %926 = vset.pattern.permute.xlu0 2
  %927 = vperm.xlu0 %926, %v658
  %v928 = vpop.permute.xlu0 %927
  %930 = vset.pattern.permute.xlu0 2
  %931 = vperm.xlu0 %930, %v659
  %v932 = vpop.permute.xlu0 %931
  %934 = vset.pattern.permute.xlu0 2
  %935 = vperm.xlu0 %934, %v660
  %v936 = vpop.permute.xlu0 %935
  %938 = vset.pattern.permute.xlu0 2
  %939 = vperm.xlu0 %938, %v661
  %v940 = vpop.permute.xlu0 %939
  %942 = vset.pattern.permute.xlu0 2
  %943 = vperm.xlu0 %942, %v662
  %v944 = vpop.permute.xlu0 %943
  %946 = vset.pattern.permute.xlu0 2
  %947 = vperm.xlu0 %946, %v663
  %v948 = vpop.permute.xlu0 %947
  %950 = vset.pattern.permute.xlu0 2
  %951 = vperm.xlu0 %950, %v664
  %v952 = vpop.permute.xlu0 %951
  %954 = vset.pattern.permute.xlu0 2
  %955 = vperm.xlu0 %954, %v665
  %v956 = vpop.permute.xlu0 %955
  %v958 = vmul.f32 %v634, %v896
  %v959 = vmul.f32 %v635, %v900
  %v960 = vmul.f32 %v636, %v904
  %v961 = vmul.f32 %v637, %v908
  %v962 = vmul.f32 %v638, %v912
  %v963 = vmul.f32 %v639, %v916
  %v964 = vmul.f32 %v640, %v920
  %v965 = vmul.f32 %v641, %v924
  %v966 = vmul.f32 %v642, %v928
  %v967 = vmul.f32 %v643, %v932
  %v968 = vmul.f32 %v644, %v936
  %v969 = vmul.f32 %v645, %v940
  %v970 = vmul.f32 %v646, %v944
  %v971 = vmul.f32 %v647, %v948
  %v972 = vmul.f32 %v648, %v952
  %v973 = vmul.f32 %v649, %v956
  %v974 = vadd.f32 %v958, %v959
  %v975 = vadd.f32 %v974, %v960
  %v976 = vadd.f32 %v975, %v961
  %v977 = vadd.f32 %v976, %v962
  %v978 = vadd.f32 %v977, %v963
  %v979 = vadd.f32 %v978, %v964
  %v980 = vadd.f32 %v979, %v965
  %v981 = vadd.f32 %v980, %v966
  %v982 = vadd.f32 %v981, %v967
  %v983 = vadd.f32 %v982, %v968
  %v984 = vadd.f32 %v983, %v969
  %v985 = vadd.f32 %v984, %v970
  %v986 = vadd.f32 %v985, %v971
  %v987 = vadd.f32 %v986, %v972
  %v988 = vadd.f32 %v987, %v973
  %v989 = vrot.slane %v988, 4
  %v990 = vadd.f32 %v988, %v989
  %v991 = vrot.slane %v990, 2
  %v992 = vadd.f32 %v990, %v991
  %v993 = vrot.slane %v992, 1
  %v994 = vadd.f32 %v992, %v993
  %v995 = vadd.f32 %v994, %v787
  %996 = vst [vmem:[%s5] sm:$0x4] %v995
  %997 = vset.pattern.permute.xlu0 3
  %998 = vperm.xlu0 %997, %v650
  %v999 = vpop.permute.xlu0 %998
  %1001 = vset.pattern.permute.xlu0 3
  %1002 = vperm.xlu0 %1001, %v651
  %v1003 = vpop.permute.xlu0 %1002
  %1005 = vset.pattern.permute.xlu0 3
  %1006 = vperm.xlu0 %1005, %v652
  %v1007 = vpop.permute.xlu0 %1006
  %1009 = vset.pattern.permute.xlu0 3
  %1010 = vperm.xlu0 %1009, %v653
  %v1011 = vpop.permute.xlu0 %1010
  %1013 = vset.pattern.permute.xlu0 3
  %1014 = vperm.xlu0 %1013, %v654
  %v1015 = vpop.permute.xlu0 %1014
  %1017 = vset.pattern.permute.xlu0 3
  %1018 = vperm.xlu0 %1017, %v655
  %v1019 = vpop.permute.xlu0 %1018
  %1021 = vset.pattern.permute.xlu0 3
  %1022 = vperm.xlu0 %1021, %v656
  %v1023 = vpop.permute.xlu0 %1022
  %1025 = vset.pattern.permute.xlu0 3
  %1026 = vperm.xlu0 %1025, %v657
  %v1027 = vpop.permute.xlu0 %1026
  %1029 = vset.pattern.permute.xlu0 3
  %1030 = vperm.xlu0 %1029, %v658
  %v1031 = vpop.permute.xlu0 %1030
  %1033 = vset.pattern.permute.xlu0 3
  %1034 = vperm.xlu0 %1033, %v659
  %v1035 = vpop.permute.xlu0 %1034
  %1037 = vset.pattern.permute.xlu0 3
  %1038 = vperm.xlu0 %1037, %v660
  %v1039 = vpop.permute.xlu0 %1038
  %1041 = vset.pattern.permute.xlu0 3
  %1042 = vperm.xlu0 %1041, %v661
  %v1043 = vpop.permute.xlu0 %1042
  %1045 = vset.pattern.permute.xlu0 3
  %1046 = vperm.xlu0 %1045, %v662
  %v1047 = vpop.permute.xlu0 %1046
  %1049 = vset.pattern.permute.xlu0 3
  %1050 = vperm.xlu0 %1049, %v663
  %v1051 = vpop.permute.xlu0 %1050
  %1053 = vset.pattern.permute.xlu0 3
  %1054 = vperm.xlu0 %1053, %v664
  %v1055 = vpop.permute.xlu0 %1054
  %1057 = vset.pattern.permute.xlu0 3
  %1058 = vperm.xlu0 %1057, %v665
  %v1059 = vpop.permute.xlu0 %1058
  %v1061 = vmul.f32 %v634, %v999
  %v1062 = vmul.f32 %v635, %v1003
  %v1063 = vmul.f32 %v636, %v1007
  %v1064 = vmul.f32 %v637, %v1011
  %v1065 = vmul.f32 %v638, %v1015
  %v1066 = vmul.f32 %v639, %v1019
  %v1067 = vmul.f32 %v640, %v1023
  %v1068 = vmul.f32 %v641, %v1027
  %v1069 = vmul.f32 %v642, %v1031
  %v1070 = vmul.f32 %v643, %v1035
  %v1071 = vmul.f32 %v644, %v1039
  %v1072 = vmul.f32 %v645, %v1043
  %v1073 = vmul.f32 %v646, %v1047
  %v1074 = vmul.f32 %v647, %v1051
  %v1075 = vmul.f32 %v648, %v1055
  %v1076 = vmul.f32 %v649, %v1059
  %v1077 = vadd.f32 %v1061, %v1062
  %v1078 = vadd.f32 %v1077, %v1063
  %v1079 = vadd.f32 %v1078, %v1064
  %v1080 = vadd.f32 %v1079, %v1065
  %v1081 = vadd.f32 %v1080, %v1066
  %v1082 = vadd.f32 %v1081, %v1067
  %v1083 = vadd.f32 %v1082, %v1068
  %v1084 = vadd.f32 %v1083, %v1069
  %v1085 = vadd.f32 %v1084, %v1070
  %v1086 = vadd.f32 %v1085, %v1071
  %v1087 = vadd.f32 %v1086, %v1072
  %v1088 = vadd.f32 %v1087, %v1073
  %v1089 = vadd.f32 %v1088, %v1074
  %v1090 = vadd.f32 %v1089, %v1075
  %v1091 = vadd.f32 %v1090, %v1076
  %v1092 = vrot.slane %v1091, 4
  %v1093 = vadd.f32 %v1091, %v1092
  %v1094 = vrot.slane %v1093, 2
  %v1095 = vadd.f32 %v1093, %v1094
  %v1096 = vrot.slane %v1095, 1
  %v1097 = vadd.f32 %v1095, %v1096
  %v1098 = vadd.f32 %v1097, %v787
  %1099 = vst [vmem:[%s5] sm:$0x8] %v1098
  %1100 = vset.pattern.permute.xlu0 4
  %1101 = vperm.xlu0 %1100, %v650
  %v1102 = vpop.permute.xlu0 %1101
  %1104 = vset.pattern.permute.xlu0 4
  %1105 = vperm.xlu0 %1104, %v651
  %v1106 = vpop.permute.xlu0 %1105
  %1108 = vset.pattern.permute.xlu0 4
  %1109 = vperm.xlu0 %1108, %v652
  %v1110 = vpop.permute.xlu0 %1109
  %1112 = vset.pattern.permute.xlu0 4
  %1113 = vperm.xlu0 %1112, %v653
  %v1114 = vpop.permute.xlu0 %1113
  %1116 = vset.pattern.permute.xlu0 4
  %1117 = vperm.xlu0 %1116, %v654
  %v1118 = vpop.permute.xlu0 %1117
  %1120 = vset.pattern.permute.xlu0 4
  %1121 = vperm.xlu0 %1120, %v655
  %v1122 = vpop.permute.xlu0 %1121
  %1124 = vset.pattern.permute.xlu0 4
  %1125 = vperm.xlu0 %1124, %v656
  %v1126 = vpop.permute.xlu0 %1125
  %1128 = vset.pattern.permute.xlu0 4
  %1129 = vperm.xlu0 %1128, %v657
  %v1130 = vpop.permute.xlu0 %1129
  %1132 = vset.pattern.permute.xlu0 4
  %1133 = vperm.xlu0 %1132, %v658
  %v1134 = vpop.permute.xlu0 %1133
  %1136 = vset.pattern.permute.xlu0 4
  %1137 = vperm.xlu0 %1136, %v659
  %v1138 = vpop.permute.xlu0 %1137
  %1140 = vset.pattern.permute.xlu0 4
  %1141 = vperm.xlu0 %1140, %v660
  %v1142 = vpop.permute.xlu0 %1141
  %1144 = vset.pattern.permute.xlu0 4
  %1145 = vperm.xlu0 %1144, %v661
  %v1146 = vpop.permute.xlu0 %1145
  %1148 = vset.pattern.permute.xlu0 4
  %1149 = vperm.xlu0 %1148, %v662
  %v1150 = vpop.permute.xlu0 %1149
  %1152 = vset.pattern.permute.xlu0 4
  %1153 = vperm.xlu0 %1152, %v663
  %v1154 = vpop.permute.xlu0 %1153
  %1156 = vset.pattern.permute.xlu0 4
  %1157 = vperm.xlu0 %1156, %v664
  %v1158 = vpop.permute.xlu0 %1157
  %1160 = vset.pattern.permute.xlu0 4
  %1161 = vperm.xlu0 %1160, %v665
  %v1162 = vpop.permute.xlu0 %1161
  %v1164 = vmul.f32 %v634, %v1102
  %v1165 = vmul.f32 %v635, %v1106
  %v1166 = vmul.f32 %v636, %v1110
  %v1167 = vmul.f32 %v637, %v1114
  %v1168 = vmul.f32 %v638, %v1118
  %v1169 = vmul.f32 %v639, %v1122
  %v1170 = vmul.f32 %v640, %v1126
  %v1171 = vmul.f32 %v641, %v1130
  %v1172 = vmul.f32 %v642, %v1134
  %v1173 = vmul.f32 %v643, %v1138
  %v1174 = vmul.f32 %v644, %v1142
  %v1175 = vmul.f32 %v645, %v1146
  %v1176 = vmul.f32 %v646, %v1150
  %v1177 = vmul.f32 %v647, %v1154
  %v1178 = vmul.f32 %v648, %v1158
  %v1179 = vmul.f32 %v649, %v1162
  %v1180 = vadd.f32 %v1164, %v1165
  %v1181 = vadd.f32 %v1180, %v1166
  %v1182 = vadd.f32 %v1181, %v1167
  %v1183 = vadd.f32 %v1182, %v1168
  %v1184 = vadd.f32 %v1183, %v1169
  %v1185 = vadd.f32 %v1184, %v1170
  %v1186 = vadd.f32 %v1185, %v1171
  %v1187 = vadd.f32 %v1186, %v1172
  %v1188 = vadd.f32 %v1187, %v1173
  %v1189 = vadd.f32 %v1188, %v1174
  %v1190 = vadd.f32 %v1189, %v1175
  %v1191 = vadd.f32 %v1190, %v1176
  %v1192 = vadd.f32 %v1191, %v1177
  %v1193 = vadd.f32 %v1192, %v1178
  %v1194 = vadd.f32 %v1193, %v1179
  %v1195 = vrot.slane %v1194, 4
  %v1196 = vadd.f32 %v1194, %v1195
  %v1197 = vrot.slane %v1196, 2
  %v1198 = vadd.f32 %v1196, %v1197
  %v1199 = vrot.slane %v1198, 1
  %v1200 = vadd.f32 %v1198, %v1199
  %v1201 = vadd.f32 %v1200, %v787
  %1202 = vst [vmem:[%s5] sm:$0x10] %v1201
  // Predicated region
  $region22: #{classification_model_forward.1} parent=0 // pred_check
    _
  $region23: #{classification_model_forward.1} parent=0 // pred_check_branch
    %1204 = sbr.rel (0) target = $region25
  $region24: #{classification_model_forward.1} parent=0 // pred_region
    _
  $region25: #{classification_model_forward.1} parent=0 // pred_fallthru
    _
  // Predicated region
  $region26: #{classification_model_forward.1} parent=0 // pred_check
    _
  $region27: #{classification_model_forward.1} parent=0 // pred_check_branch
    %1206 = sbr.rel (0) target = $region29
  $region28: #{classification_model_forward.1} parent=0 // pred_region
    _
  $region29: #{classification_model_forward.1} parent=0 // pred_fallthru
    _

</llo_original>
